<compile_context>
chip_gen: v7x
topology: tpu7x:2x2x1
jax: 0.10.0
libtpu: 0.0.40
codegen_flags: <defaults>
</compile_context>

<pallas_src>
import functools

import jax
import jax.numpy as jnp
from jax import lax
from jax.experimental import pallas as pl
from jax.experimental.pallas import tpu as pltpu


# ---------------------------------------------------------------------------
# Pallas kernel: (patches @ W_fused) + bias_fused, optional GELU.
# ---------------------------------------------------------------------------
def _matmul_bias_act_kernel(a_ref, w_ref, b_ref, o_ref, *, apply_gelu):
    # a_ref: (tm, K)  w_ref: (K, N)  b_ref: (1, N)  o_ref: (tm, N)
    acc = jnp.dot(a_ref[...], w_ref[...], preferred_element_type=jnp.float32)
    acc = acc + b_ref[...]                      # broadcast (1, N) over rows (VPU)
    if apply_gelu:
        # tanh-approx GELU: 0.5*x*(1 + tanh(sqrt(2/pi)*(x + 0.044715 x^3)))
        c0 = 0.7978845608028654
        acc = 0.5 * acc * (1.0 + jnp.tanh(c0 * (acc + 0.044715 * acc * acc * acc)))
    o_ref[...] = acc.astype(o_ref.dtype)


def _pick_tile_m(M, K, N, itemsize):
    """Largest row tile keeping double-buffered blocks + resident W < ~24 MiB."""
    budget = 24 * 1024 * 1024
    budget -= 2 * K * N * itemsize              # resident fused weights (2 bufs)
    per_row = 2 * (K + N) * itemsize            # double-buffered A row + O row
    cap = max(8, budget // max(per_row, 1))
    tm = min(M, 2048, cap)
    if tm >= M:
        return M                                # full dim is always a legal block
    return max(8, (tm // 8) * 8)                # sublane axis: multiple of 8


def _fused_matmul_bias_act(a, w, b, *, apply_gelu, out_dtype):
    """a: (M, K), w: (K, N), b: (1, N) -> (M, N) with fused bias (+ GELU)."""
    M, K = a.shape
    _, N = w.shape
    itemsize = jnp.dtype(a.dtype).itemsize
    tm = _pick_tile_m(M, K, N, itemsize)
    grid_m = pl.cdiv(M, tm)

    cost = pl.CostEstimate(
        flops=2 * M * K * N,
        transcendentals=M * N if apply_gelu else 0,
        bytes_accessed=(M * K + K * N + N) * itemsize
        + M * N * jnp.dtype(out_dtype).itemsize,
    )

    return pl.pallas_call(
        functools.partial(_matmul_bias_act_kernel, apply_gelu=apply_gelu),
        out_shape=jax.ShapeDtypeStruct((M, N), out_dtype),
        grid_spec=pltpu.PrefetchScalarGridSpec(
            num_scalar_prefetch=0,
            grid=(grid_m,),
            in_specs=[
                pl.BlockSpec((tm, K), lambda i: (i, 0)),   # patch rows (pipelined)
                pl.BlockSpec((K, N), lambda i: (0, 0)),    # fused weights (resident)
                pl.BlockSpec((1, N), lambda i: (0, 0)),    # fused bias (resident)
            ],
            out_specs=pl.BlockSpec((tm, N), lambda i: (i, 0)),
        ),
        compiler_params=pltpu.CompilerParams(
            dimension_semantics=("parallel",),
        ),
        cost_estimate=cost,
    )(a, w, b)


# ---------------------------------------------------------------------------
# Host-side layout plumbing (im2col for 3x3 / stride 2 / pad 1) + BN folding.
# ---------------------------------------------------------------------------
def _im2col_3x3_s2_p1(x_nhwc):
    """x: (B, H, W, C) -> patches (B*OH*OW, 9*C), plus (OH, OW)."""
    B, H, W, C = x_nhwc.shape
    OH, OW = (H + 1) // 2, (W + 1) // 2
    xp = jnp.pad(x_nhwc, ((0, 0), (1, 1), (1, 1), (0, 0)))
    taps = []
    for kh in range(3):
        for kw in range(3):
            taps.append(
                lax.slice(
                    xp,
                    (0, kh, kw, 0),
                    (B, kh + 2 * (OH - 1) + 1, kw + 2 * (OW - 1) + 1, C),
                    (1, 2, 2, 1),
                )
            )
    patches = jnp.concatenate(taps, axis=-1)            # (B, OH, OW, 9*C)
    return patches.reshape(B * OH * OW, 9 * C), (OH, OW)


def _fuse_conv_bn(w_hwio, gamma, beta, mean, var, eps):
    """Fold eval-mode BatchNorm2d into the conv: returns (9*Cin, Cout), (1, Cout)."""
    scale = gamma.astype(jnp.float32) / jnp.sqrt(var.astype(jnp.float32) + eps)
    w = w_hwio.astype(jnp.float32) * scale[None, None, None, :]
    kh, kw, cin, cout = w_hwio.shape
    w_mat = w.reshape(kh * kw * cin, cout)
    bias = (beta.astype(jnp.float32) - mean.astype(jnp.float32) * scale).reshape(1, cout)
    return w_mat, bias


def patch_embed(x_nchw, params, *, eps=1e-5):
    """PatchEmbed forward: Conv2d_BN -> GELU -> Conv2d_BN (BN in eval mode)."""
    B = x_nchw.shape[0]
    x = jnp.transpose(x_nchw, (0, 2, 3, 1))             # NHWC: channels lane-dense

    # ---- stage 1: conv 3x3 s2 p1 + BN + GELU (fused in one kernel) ----
    w1, b1 = _fuse_conv_bn(params["w1"], params["bn1_gamma"], params["bn1_beta"],
                           params["bn1_mean"], params["bn1_var"], eps)
    p1, (OH1, OW1) = _im2col_3x3_s2_p1(x)
    h1 = _fused_matmul_bias_act(p1, w1, b1, apply_gelu=True, out_dtype=x.dtype)
    h1 = h1.reshape(B, OH1, OW1, -1)

    # ---- stage 2: conv 3x3 s2 p1 + BN (fused in one kernel) ----
    w2, b2 = _fuse_conv_bn(params["w2"], params["bn2_gamma"], params["bn2_beta"],
                           params["bn2_mean"], params["bn2_var"], eps)
    p2, (OH2, OW2) = _im2col_3x3_s2_p1(h1)
    h2 = _fused_matmul_bias_act(p2, w2, b2, apply_gelu=False, out_dtype=x.dtype)
    h2 = h2.reshape(B, OH2, OW2, -1)

    return jnp.transpose(h2, (0, 3, 1, 2))              # back to NCHW


# ---------------------------------------------------------------------------
# Pure-JAX reference mirroring the PyTorch forward (eval-mode BN, tanh GELU).
# ---------------------------------------------------------------------------
def patch_embed_ref(x_nchw, params, *, eps=1e-5):
    def conv_bn(x, w_hwio, gamma, beta, mean, var):
        y = lax.conv_general_dilated(
            x.astype(jnp.float32), w_hwio.astype(jnp.float32),
            window_strides=(2, 2), padding=((1, 1), (1, 1)),
            dimension_numbers=("NCHW", "HWIO", "NCHW"))
        scale = gamma / jnp.sqrt(var + eps)
        shift = beta - mean * scale
        return y * scale[None, :, None, None] + shift[None, :, None, None]

    h = conv_bn(x_nchw, params["w1"], params["bn1_gamma"], params["bn1_beta"],
                params["bn1_mean"], params["bn1_var"])
    h = jax.nn.gelu(h, approximate=True)
    h = conv_bn(h, params["w2"], params["bn2_gamma"], params["bn2_beta"],
                params["bn2_mean"], params["bn2_var"])
    return h.astype(x_nchw.dtype)


if __name__ == "__main__":
    key = jax.random.PRNGKey(0)
    B, Cin, H, W = 2, 3, 16, 16
    embed_dim = 64
    C1 = embed_dim // 2

    ks = jax.random.split(key, 11)
    x = jax.random.normal(ks[0], (B, Cin, H, W), dtype=jnp.float32)

    # Conv weights in HWIO layout; BN with non-trivial running stats so the
    # eval-mode fusion is actually exercised.
    params = {
        "w1": 0.2 * jax.random.normal(ks[1], (3, 3, Cin, C1), jnp.float32),
        "bn1_gamma": 1.0 + 0.1 * jax.random.normal(ks[2], (C1,), jnp.float32),
        "bn1_beta": 0.1 * jax.random.normal(ks[3], (C1,), jnp.float32),
        "bn1_mean": 0.1 * jax.random.normal(ks[4], (C1,), jnp.float32),
        "bn1_var": 0.5 + jnp.abs(jax.random.normal(ks[5], (C1,), jnp.float32)),
        "w2": 0.1 * jax.random.normal(ks[6], (3, 3, C1, embed_dim), jnp.float32),
        "bn2_gamma": 1.0 + 0.1 * jax.random.normal(ks[7], (embed_dim,), jnp.float32),
        "bn2_beta": 0.1 * jax.random.normal(ks[8], (embed_dim,), jnp.float32),
        "bn2_mean": 0.1 * jax.random.normal(ks[9], (embed_dim,), jnp.float32),
        "bn2_var": 0.5 + jnp.abs(jax.random.normal(ks[10], (embed_dim,), jnp.float32)),
    }

    out = jax.jit(patch_embed)(x, params)
    out = jax.block_until_ready(out)

    ref = patch_embed_ref(x, params)
    assert out.shape == (B, embed_dim, H // 4, W // 4), out.shape
    assert jnp.allclose(out, ref, atol=1e-4, rtol=1e-4), float(
        jnp.max(jnp.abs(out - ref)))

    print("KERNEL_OK")
</pallas_src>

<mosaic_0001>
module attributes {stable_mosaic.version = 11 : i64} {
  func.func @_matmul_bias_act_kernel(%arg0: i32, %arg1: memref<128x27xf32, #tpu.memory_space<vmem>>, %arg2: memref<27x32xf32, #tpu.memory_space<vmem>>, %arg3: memref<1x32xf32, #tpu.memory_space<vmem>>, %arg4: memref<128x32xf32, #tpu.memory_space<vmem>>) attributes {dimension_semantics = [#tpu.dimension_semantics<parallel>], iteration_bounds = array<i64: 1>, scalar_prefetch = 0 : i64, scratch_operands = 0 : i64, tpu.core_type = #tpu.core_type<tc>, window_params = [{transform_indices = @transform_0, window_bounds = array<i64: 128, 27>}, {pipeline_mode = #tpu.pipeline_mode<synchronous>, transform_indices = @transform_1, window_bounds = array<i64: 27, 32>}, {pipeline_mode = #tpu.pipeline_mode<synchronous>, transform_indices = @transform_2, window_bounds = array<i64: 1, 32>}, {transform_indices = @transform_3, window_bounds = array<i64: 128, 32>}]} {
    %c0 = arith.constant 0 : index
    %c0_0 = arith.constant 0 : index
    %0 = vector.load %arg1[%c0, %c0_0] : memref<128x27xf32, #tpu.memory_space<vmem>>, vector<128x27xf32>
    %c0_1 = arith.constant 0 : index
    %c0_2 = arith.constant 0 : index
    %1 = vector.load %arg2[%c0_1, %c0_2] : memref<27x32xf32, #tpu.memory_space<vmem>>, vector<27x32xf32>
    %cst = arith.constant dense<0.000000e+00> : vector<128x32xf32>
    %2 = tpu.matmul %0, %1, %cst {dimension_numbers = #tpu.dot_dimension_numbers<[1], [0], [0], [1], [0, 0, 1, 1], [], []>} : vector<128x27xf32>, vector<27x32xf32>, vector<128x32xf32> -> vector<128x32xf32>
    %c0_3 = arith.constant 0 : index
    %c0_4 = arith.constant 0 : index
    %3 = vector.load %arg3[%c0_3, %c0_4] : memref<1x32xf32, #tpu.memory_space<vmem>>, vector<1x32xf32>
    %4 = vector.broadcast %3 : vector<1x32xf32> to vector<128x32xf32>
    %5 = arith.addf %2, %4 : vector<128x32xf32>
    %cst_5 = arith.constant 5.000000e-01 : f32
    %6 = vector.broadcast %cst_5 : f32 to vector<128x32xf32>
    %7 = arith.mulf %6, %5 : vector<128x32xf32>
    %cst_6 = arith.constant 4.471500e-02 : f32
    %8 = vector.broadcast %cst_6 : f32 to vector<128x32xf32>
    %9 = arith.mulf %8, %5 : vector<128x32xf32>
    %10 = arith.mulf %9, %5 : vector<128x32xf32>
    %11 = arith.mulf %10, %5 : vector<128x32xf32>
    %12 = arith.addf %5, %11 : vector<128x32xf32>
    %cst_7 = arith.constant 0.797884583 : f32
    %13 = vector.broadcast %cst_7 : f32 to vector<128x32xf32>
    %14 = arith.mulf %13, %12 : vector<128x32xf32>
    %15 = math.tanh %14 : vector<128x32xf32>
    %cst_8 = arith.constant 1.000000e+00 : f32
    %16 = vector.broadcast %cst_8 : f32 to vector<128x32xf32>
    %17 = arith.addf %16, %15 : vector<128x32xf32>
    %18 = arith.mulf %7, %17 : vector<128x32xf32>
    %c0_9 = arith.constant 0 : index
    %c0_10 = arith.constant 0 : index
    %19 = vector.load %arg4[%c0_9, %c0_10] : memref<128x32xf32, #tpu.memory_space<vmem>>, vector<128x32xf32>
    tpu.vector_store %arg4[%c0_9, %c0_10], %18 {strides = array<i32>} : memref<128x32xf32, #tpu.memory_space<vmem>>, vector<128x32xf32>,
    return
  }
  func.func @transform_0(%arg0: i32) -> (i32, i32) {
    %c0_i32 = arith.constant 0 : i32
    %c0_i32_0 = arith.constant 0 : i32
    return %arg0, %c0_i32 : i32, i32
  }
  func.func @transform_1(%arg0: i32) -> (i32, i32) {
    %c0_i32 = arith.constant 0 : i32
    %c0_i32_0 = arith.constant 0 : i32
    %c0_i32_1 = arith.constant 0 : i32
    return %c0_i32, %c0_i32_0 : i32, i32
  }
  func.func @transform_2(%arg0: i32) -> (i32, i32) {
    %c0_i32 = arith.constant 0 : i32
    %c0_i32_0 = arith.constant 0 : i32
    %c0_i32_1 = arith.constant 0 : i32
    return %c0_i32, %c0_i32_0 : i32, i32
  }
  func.func @transform_3(%arg0: i32) -> (i32, i32) {
    %c0_i32 = arith.constant 0 : i32
    %c0_i32_0 = arith.constant 0 : i32
    return %arg0, %c0_i32 : i32, i32
  }
}

module attributes {stable_mosaic.version = 11 : i64} {
  func.func @_matmul_bias_act_kernel(%arg0: i32, %arg1: memref<32x288xf32, #tpu.memory_space<vmem>>, %arg2: memref<288x64xf32, #tpu.memory_space<vmem>>, %arg3: memref<1x64xf32, #tpu.memory_space<vmem>>, %arg4: memref<32x64xf32, #tpu.memory_space<vmem>>) attributes {dimension_semantics = [#tpu.dimension_semantics<parallel>], iteration_bounds = array<i64: 1>, scalar_prefetch = 0 : i64, scratch_operands = 0 : i64, tpu.core_type = #tpu.core_type<tc>, window_params = [{transform_indices = @transform_0, window_bounds = array<i64: 32, 288>}, {pipeline_mode = #tpu.pipeline_mode<synchronous>, transform_indices = @transform_1, window_bounds = array<i64: 288, 64>}, {pipeline_mode = #tpu.pipeline_mode<synchronous>, transform_indices = @transform_2, window_bounds = array<i64: 1, 64>}, {transform_indices = @transform_3, window_bounds = array<i64: 32, 64>}]} {
    %c0 = arith.constant 0 : index
    %c0_0 = arith.constant 0 : index
    %0 = vector.load %arg1[%c0, %c0_0] : memref<32x288xf32, #tpu.memory_space<vmem>>, vector<32x288xf32>
    %c0_1 = arith.constant 0 : index
    %c0_2 = arith.constant 0 : index
    %1 = vector.load %arg2[%c0_1, %c0_2] : memref<288x64xf32, #tpu.memory_space<vmem>>, vector<288x64xf32>
    %cst = arith.constant dense<0.000000e+00> : vector<32x64xf32>
    %2 = tpu.matmul %0, %1, %cst {dimension_numbers = #tpu.dot_dimension_numbers<[1], [0], [0], [1], [0, 0, 1, 1], [], []>} : vector<32x288xf32>, vector<288x64xf32>, vector<32x64xf32> -> vector<32x64xf32>
    %c0_3 = arith.constant 0 : index
    %c0_4 = arith.constant 0 : index
    %3 = vector.load %arg3[%c0_3, %c0_4] : memref<1x64xf32, #tpu.memory_space<vmem>>, vector<1x64xf32>
    %4 = vector.broadcast %3 : vector<1x64xf32> to vector<32x64xf32>
    %5 = arith.addf %2, %4 : vector<32x64xf32>
    %c0_5 = arith.constant 0 : index
    %c0_6 = arith.constant 0 : index
    %6 = vector.load %arg4[%c0_5, %c0_6] : memref<32x64xf32, #tpu.memory_space<vmem>>, vector<32x64xf32>
    tpu.vector_store %arg4[%c0_5, %c0_6], %5 {strides = array<i32>} : memref<32x64xf32, #tpu.memory_space<vmem>>, vector<32x64xf32>,
    return
  }
  func.func @transform_0(%arg0: i32) -> (i32, i32) {
    %c0_i32 = arith.constant 0 : i32
    %c0_i32_0 = arith.constant 0 : i32
    return %arg0, %c0_i32 : i32, i32
  }
  func.func @transform_1(%arg0: i32) -> (i32, i32) {
    %c0_i32 = arith.constant 0 : i32
    %c0_i32_0 = arith.constant 0 : i32
    %c0_i32_1 = arith.constant 0 : i32
    return %c0_i32, %c0_i32_0 : i32, i32
  }
  func.func @transform_2(%arg0: i32) -> (i32, i32) {
    %c0_i32 = arith.constant 0 : i32
    %c0_i32_0 = arith.constant 0 : i32
    %c0_i32_1 = arith.constant 0 : i32
    return %c0_i32, %c0_i32_0 : i32, i32
  }
  func.func @transform_3(%arg0: i32) -> (i32, i32) {
    %c0_i32 = arith.constant 0 : i32
    %c0_i32_0 = arith.constant 0 : i32
    return %arg0, %c0_i32 : i32, i32
  }
}

</mosaic_0001>

<llo_original>
// kernel: patch_embed.2
$region0: #{patch_embed.2}
  #allocation0 [shape = 'u32[]', space=smem, size = 0x4, offset = 0x4, fixed_abs, tag = 'smem constant byte address 0x4 - core index']
  #allocation1 [shape = 'u32[144,128]{1,0:T(1,128)}', space=vmem, size = 0x12000, scoped, tag = 'internal scratch']
  %s0 = inlined_call_operand.vmem [shape: f32[128,27], index: 0, kind: input, shape index: {}]
  %s1 = inlined_call_operand.vmem [shape: f32[27,32], index: 1, kind: input, shape index: {}]
  %s2 = inlined_call_operand.vmem [shape: f32[1,32], index: 2, kind: input, shape index: {}]
  %s3 = inlined_call_operand.vmem [shape: f32[128,32], index: 3, kind: output, shape index: {}]
  %s4 = sld [smem:[#allocation0]]
  $region22: #{patch_embed.2} parent=0
    _
  %s6 = ssub.s32 1, %s4
  %s7 = scalar_select 0, %s6, %s4
  // Predicated region
  $region2: #{patch_embed.2} parent=0 // pred_check
    _
  $region3: #{patch_embed.2} parent=0 // pred_check_branch
    %9 = sbr.rel (0) target = $region5
  $region4: #{patch_embed.2} parent=0 // pred_region
    _
  $region5: #{patch_embed.2} parent=0 // pred_fallthru
    _
  // Predicated region
  $region6: #{patch_embed.2} parent=0 // pred_check
    _
  $region7: #{patch_embed.2} parent=0 // pred_check_branch
    %11 = sbr.rel (0) target = $region9
  $region8: #{patch_embed.2} parent=0 // pred_region
    _
  $region9: #{patch_embed.2} parent=0 // pred_fallthru
    _
  // Predicated region
  $region10: #{patch_embed.2} parent=0 // pred_check
    _
  $region11: #{patch_embed.2} parent=0 // pred_check_branch
    %13 = sbr.rel (0) target = $region13
  $region12: #{patch_embed.2} parent=0 // pred_region
    _
  $region13: #{patch_embed.2} parent=0 // pred_fallthru
    _
  %v14 = vld [vmem:[%s0] sm:$0xff]
  %v15 = vld [vmem:[%s0 + $0x8] sm:$0xff]
  %v16 = vld [vmem:[%s0 + $0x10] sm:$0xff]
  %v17 = vld [vmem:[%s0 + $0x18] sm:$0xff]
  %v18 = vld [vmem:[%s0 + $0x20] sm:$0xff]
  %v19 = vld [vmem:[%s0 + $0x28] sm:$0xff]
  %v20 = vld [vmem:[%s0 + $0x30] sm:$0xff]
  %v21 = vld [vmem:[%s0 + $0x38] sm:$0xff]
  %v22 = vld [vmem:[%s0 + $0x40] sm:$0xff]
  %v23 = vld [vmem:[%s0 + $0x48] sm:$0xff]
  %v24 = vld [vmem:[%s0 + $0x50] sm:$0xff]
  %v25 = vld [vmem:[%s0 + $0x58] sm:$0xff]
  %v26 = vld [vmem:[%s0 + $0x60] sm:$0xff]
  %v27 = vld [vmem:[%s0 + $0x68] sm:$0xff]
  %v28 = vld [vmem:[%s0 + $0x70] sm:$0xff]
  %v29 = vld [vmem:[%s0 + $0x78] sm:$0xff]
  %v30 = vld [vmem:[%s1] sm:$0xff]
  %v31 = vld [vmem:[%s1 + $0x8] sm:$0xff]
  %v32 = vld [vmem:[%s1 + $0x10] sm:$0xff]
  %v33 = vld [vmem:[%s1 + $0x18] sm:$0x7]
  %v34 = vld [vmem:[%s2] sm:$0x1]
  %v36 = vlaneseq
  %v37 = vshrl.u32 %v36, 7
  %v38 = vsub.s32 0, %v37
  %v39 = vrot.slane %v34, %v38
  %vm41 = vcmask 220160
  %v43 = vsel %vm41, %v14, 0
  %v46 = vsel %vm41, %v15, 0
  %v49 = vsel %vm41, %v16, 0
  %v52 = vsel %vm41, %v17, 0
  %v55 = vsel %vm41, %v18, 0
  %v58 = vsel %vm41, %v19, 0
  %v61 = vsel %vm41, %v20, 0
  %v64 = vsel %vm41, %v21, 0
  %v67 = vsel %vm41, %v22, 0
  %v70 = vsel %vm41, %v23, 0
  %v73 = vsel %vm41, %v24, 0
  %v76 = vsel %vm41, %v25, 0
  %v79 = vsel %vm41, %v26, 0
  %v82 = vsel %vm41, %v27, 0
  %v85 = vsel %vm41, %v28, 0
  %v88 = vsel %vm41, %v29, 0
  %vm90 = vcmask 1042432
  %v92 = vsel %vm90, %v33, 0
  %94 = vmatprep.subr.mxu0 0.0
  %95 = vmatpush1.msra.mxu0 %v30
  %96 = vmatprep.subr.mxu0 0.0
  %97 = vmatpush1.msra.mxu0 %v31
  %98 = vmatprep.subr.mxu0 0.0
  %99 = vmatpush1.msra.mxu0 %v32
  %100 = vmatprep.subr.mxu0 0.0
  %101 = vmatpush1.msra.mxu0 %v92
  %102 = vmatprep.subr.mxu0 0.0
  %103 = vmatpush1.msra.mxu0 0.0
  %104 = vmatprep.subr.mxu0 0.0
  %105 = vmatpush1.msra.mxu0 0.0
  %106 = vmatprep.subr.mxu0 0.0
  %107 = vmatpush1.msra.mxu0 0.0
  %108 = vmatprep.subr.mxu0 0.0
  %109 = vmatpush1.msra.mxu0 0.0
  %110 = vmatprep.subr.mxu0 0.0
  %111 = vmatpush1.msra.mxu0 0.0
  %112 = vmatprep.subr.mxu0 0.0
  %113 = vmatpush1.msra.mxu0 0.0
  %114 = vmatprep.subr.mxu0 0.0
  %115 = vmatpush1.msra.mxu0 0.0
  %116 = vmatprep.subr.mxu0 0.0
  %117 = vmatpush1.msra.mxu0 0.0
  %118 = vmatprep.subr.mxu0 0.0
  %119 = vmatpush1.msra.mxu0 0.0
  %120 = vmatprep.subr.mxu0 0.0
  %121 = vmatpush1.msra.mxu0 0.0
  %122 = vmatprep.subr.mxu0 0.0
  %123 = vmatpush1.msra.mxu0 0.0
  %124 = vmatprep.subr.mxu0 0.0
  %125 = vmatpush1.msra.mxu0 0.0
  %126 = vmatprep.subr.mxu0 0.0
  %127 = vmatpush1.msra.mxu0 0.0
  %128 = vmatprep.subr.mxu0 0.0
  %129 = vmatpush1.msra.mxu0 0.0
  %130 = vmatprep.subr.mxu0 0.0
  %131 = vmatpush1.msra.mxu0 0.0
  %132 = vmatprep.subr.mxu0 0.0
  %133 = vmatpush1.msra.mxu0 0.0
  %134 = vmatprep.subr.mxu0 0.0
  %135 = vmatpush1.msra.mxu0 0.0
  %136 = vmatprep.subr.mxu0 0.0
  %137 = vmatpush1.msra.mxu0 0.0
  %138 = vmatprep.subr.mxu0 0.0
  %139 = vmatpush1.msra.mxu0 0.0
  %140 = vmatprep.subr.mxu0 0.0
  %141 = vmatpush1.msra.mxu0 0.0
  %142 = vmatprep.subr.mxu0 0.0
  %143 = vmatpush1.msra.mxu0 0.0
  %144 = vmatprep.subr.mxu0 0.0
  %145 = vmatpush1.msra.mxu0 0.0
  %146 = vmatprep.subr.mxu0 0.0
  %147 = vmatpush1.msra.mxu0 0.0
  %148 = vmatprep.subr.mxu0 0.0
  %149 = vmatpush1.msra.mxu0 0.0
  %150 = vmatprep.subr.mxu0 0.0
  %151 = vmatpush1.msra.mxu0 0.0
  %152 = vmatprep.subr.mxu0 0.0
  %153 = vmatpush1.msra.mxu0 0.0
  %154 = vmatprep.subr.mxu0 0.0
  %155 = vmatpush1.msra.mxu0 0.0
  %156 = vmatprep.subr.mxu0 0.0
  %157 = vmatpush1.msra.mxu0 0.0
  %158 = vmatprep.mubr.f32.mxu0 0.0
  %159 = vmatmul.mubr.f32.gmra.mrb[0].mxu0 %v43
  %v160 = vpop.f32.mrb[0].mxu0
  %v161 = vadd.f32 %v39, %v160
  %v162 = vpop.f32.mrb[0].mxu0
  %163 = vmatprep.mubr.f32.mxu0 0.0
  %164 = vmatmul.mubr.f32.gmra.mrb[0].mxu0 %v46
  %v165 = vpop.f32.mrb[0].mxu0
  %v166 = vadd.f32 %v39, %v165
  %v167 = vpop.f32.mrb[0].mxu0
  %168 = vmatprep.mubr.f32.mxu0 0.0
  %169 = vmatmul.mubr.f32.gmra.mrb[0].mxu0 %v49
  %v170 = vpop.f32.mrb[0].mxu0
  %v171 = vadd.f32 %v39, %v170
  %v172 = vpop.f32.mrb[0].mxu0
  %173 = vmatprep.mubr.f32.mxu0 0.0
  %174 = vmatmul.mubr.f32.gmra.mrb[0].mxu0 %v52
  %v175 = vpop.f32.mrb[0].mxu0
  %v176 = vadd.f32 %v39, %v175
  %v177 = vpop.f32.mrb[0].mxu0
  %178 = vmatprep.mubr.f32.mxu0 0.0
  %179 = vmatmul.mubr.f32.gmra.mrb[0].mxu0 %v55
  %v180 = vpop.f32.mrb[0].mxu0
  %v181 = vadd.f32 %v39, %v180
  %v182 = vpop.f32.mrb[0].mxu0
  %183 = vmatprep.mubr.f32.mxu0 0.0
  %184 = vmatmul.mubr.f32.gmra.mrb[0].mxu0 %v58
  %v185 = vpop.f32.mrb[0].mxu0
  %v186 = vadd.f32 %v39, %v185
  %v187 = vpop.f32.mrb[0].mxu0
  %188 = vmatprep.mubr.f32.mxu0 0.0
  %189 = vmatmul.mubr.f32.gmra.mrb[0].mxu0 %v61
  %v190 = vpop.f32.mrb[0].mxu0
  %v191 = vadd.f32 %v39, %v190
  %v192 = vpop.f32.mrb[0].mxu0
  %193 = vmatprep.mubr.f32.mxu0 0.0
  %194 = vmatmul.mubr.f32.gmra.mrb[0].mxu0 %v64
  %v195 = vpop.f32.mrb[0].mxu0
  %v196 = vadd.f32 %v39, %v195
  %v197 = vpop.f32.mrb[0].mxu0
  %198 = vmatprep.mubr.f32.mxu0 0.0
  %199 = vmatmul.mubr.f32.gmra.mrb[0].mxu0 %v67
  %v200 = vpop.f32.mrb[0].mxu0
  %v201 = vadd.f32 %v39, %v200
  %v202 = vpop.f32.mrb[0].mxu0
  %203 = vmatprep.mubr.f32.mxu0 0.0
  %204 = vmatmul.mubr.f32.gmra.mrb[0].mxu0 %v70
  %v205 = vpop.f32.mrb[0].mxu0
  %v206 = vadd.f32 %v39, %v205
  %v207 = vpop.f32.mrb[0].mxu0
  %208 = vmatprep.mubr.f32.mxu0 0.0
  %209 = vmatmul.mubr.f32.gmra.mrb[0].mxu0 %v73
  %v210 = vpop.f32.mrb[0].mxu0
  %v211 = vadd.f32 %v39, %v210
  %v212 = vpop.f32.mrb[0].mxu0
  %213 = vmatprep.mubr.f32.mxu0 0.0
  %214 = vmatmul.mubr.f32.gmra.mrb[0].mxu0 %v76
  %v215 = vpop.f32.mrb[0].mxu0
  %v216 = vadd.f32 %v39, %v215
  %v217 = vpop.f32.mrb[0].mxu0
  %218 = vmatprep.mubr.f32.mxu0 0.0
  %219 = vmatmul.mubr.f32.gmra.mrb[0].mxu0 %v79
  %v220 = vpop.f32.mrb[0].mxu0
  %v221 = vadd.f32 %v39, %v220
  %v222 = vpop.f32.mrb[0].mxu0
  %223 = vmatprep.mubr.f32.mxu0 0.0
  %224 = vmatmul.mubr.f32.gmra.mrb[0].mxu0 %v82
  %v225 = vpop.f32.mrb[0].mxu0
  %v226 = vadd.f32 %v39, %v225
  %v227 = vpop.f32.mrb[0].mxu0
  %228 = vmatprep.mubr.f32.mxu0 0.0
  %229 = vmatmul.mubr.f32.gmra.mrb[0].mxu0 %v85
  %v230 = vpop.f32.mrb[0].mxu0
  %v231 = vadd.f32 %v39, %v230
  %v232 = vpop.f32.mrb[0].mxu0
  %233 = vmatprep.mubr.f32.mxu0 0.0
  %234 = vmatmul.mubr.f32.gmra.mrb[0].mxu0 %v88
  %v235 = vpop.f32.mrb[0].mxu0
  %v236 = vadd.f32 %v39, %v235
  %v237 = vpop.f32.mrb[0].mxu0
  %238 = vdwg.mxu0
  %v239 = vmul.f32 %v161, 0.5
  %v240 = vmul.f32 %v166, 0.5
  %v241 = vmul.f32 %v171, 0.5
  %v242 = vmul.f32 %v176, 0.5
  %v243 = vmul.f32 %v181, 0.5
  %v244 = vmul.f32 %v186, 0.5
  %v245 = vmul.f32 %v191, 0.5
  %v246 = vmul.f32 %v196, 0.5
  %v247 = vmul.f32 %v201, 0.5
  %v248 = vmul.f32 %v206, 0.5
  %v249 = vmul.f32 %v211, 0.5
  %v250 = vmul.f32 %v216, 0.5
  %v251 = vmul.f32 %v221, 0.5
  %v252 = vmul.f32 %v226, 0.5
  %v253 = vmul.f32 %v231, 0.5
  %v254 = vmul.f32 %v236, 0.5
  %v255 = vmul.f32 %v161, 0.044715
  %v256 = vmul.f32 %v166, 0.044715
  %v257 = vmul.f32 %v171, 0.044715
  %v258 = vmul.f32 %v176, 0.044715
  %v259 = vmul.f32 %v181, 0.044715
  %v260 = vmul.f32 %v186, 0.044715
  %v261 = vmul.f32 %v191, 0.044715
  %v262 = vmul.f32 %v196, 0.044715
  %v263 = vmul.f32 %v201, 0.044715
  %v264 = vmul.f32 %v206, 0.044715
  %v265 = vmul.f32 %v211, 0.044715
  %v266 = vmul.f32 %v216, 0.044715
  %v267 = vmul.f32 %v221, 0.044715
  %v268 = vmul.f32 %v226, 0.044715
  %v269 = vmul.f32 %v231, 0.044715
  %v270 = vmul.f32 %v236, 0.044715
  %v271 = vmul.f32 %v255, %v161
  %v272 = vmul.f32 %v256, %v166
  %v273 = vmul.f32 %v257, %v171
  %v274 = vmul.f32 %v258, %v176
  %v275 = vmul.f32 %v259, %v181
  %v276 = vmul.f32 %v260, %v186
  %v277 = vmul.f32 %v261, %v191
  %v278 = vmul.f32 %v262, %v196
  %v279 = vmul.f32 %v263, %v201
  %v280 = vmul.f32 %v264, %v206
  %v281 = vmul.f32 %v265, %v211
  %v282 = vmul.f32 %v266, %v216
  %v283 = vmul.f32 %v267, %v221
  %v284 = vmul.f32 %v268, %v226
  %v285 = vmul.f32 %v269, %v231
  %v286 = vmul.f32 %v270, %v236
  %v287 = vmul.f32 %v271, %v161
  %v288 = vmul.f32 %v272, %v166
  %v289 = vmul.f32 %v273, %v171
  %v290 = vmul.f32 %v274, %v176
  %v291 = vmul.f32 %v275, %v181
  %v292 = vmul.f32 %v276, %v186
  %v293 = vmul.f32 %v277, %v191
  %v294 = vmul.f32 %v278, %v196
  %v295 = vmul.f32 %v279, %v201
  %v296 = vmul.f32 %v280, %v206
  %v297 = vmul.f32 %v281, %v211
  %v298 = vmul.f32 %v282, %v216
  %v299 = vmul.f32 %v283, %v221
  %v300 = vmul.f32 %v284, %v226
  %v301 = vmul.f32 %v285, %v231
  %v302 = vmul.f32 %v286, %v236
  %v303 = vadd.f32 %v161, %v287
  %v304 = vadd.f32 %v166, %v288
  %v305 = vadd.f32 %v171, %v289
  %v306 = vadd.f32 %v176, %v290
  %v307 = vadd.f32 %v181, %v291
  %v308 = vadd.f32 %v186, %v292
  %v309 = vadd.f32 %v191, %v293
  %v310 = vadd.f32 %v196, %v294
  %v311 = vadd.f32 %v201, %v295
  %v312 = vadd.f32 %v206, %v296
  %v313 = vadd.f32 %v211, %v297
  %v314 = vadd.f32 %v216, %v298
  %v315 = vadd.f32 %v221, %v299
  %v316 = vadd.f32 %v226, %v300
  %v317 = vadd.f32 %v231, %v301
  %v318 = vadd.f32 %v236, %v302
  %v319 = vmul.f32 %v303, 0.7978846
  %v320 = vmul.f32 %v304, 0.7978846
  %v321 = vmul.f32 %v305, 0.7978846
  %v322 = vmul.f32 %v306, 0.7978846
  %v323 = vmul.f32 %v307, 0.7978846
  %v324 = vmul.f32 %v308, 0.7978846
  %v325 = vmul.f32 %v309, 0.7978846
  %v326 = vmul.f32 %v310, 0.7978846
  %v327 = vmul.f32 %v311, 0.7978846
  %v328 = vmul.f32 %v312, 0.7978846
  %v329 = vmul.f32 %v313, 0.7978846
  %v330 = vmul.f32 %v314, 0.7978846
  %v331 = vmul.f32 %v315, 0.7978846
  %v332 = vmul.f32 %v316, 0.7978846
  %v333 = vmul.f32 %v317, 0.7978846
  %v334 = vmul.f32 %v318, 0.7978846
  %v335 = vtanh.pop %v319
  %v336 = vtanh.pop %v320
  %v337 = vtanh.pop %v321
  %v338 = vtanh.pop %v322
  %v339 = vtanh.pop %v323
  %v340 = vtanh.pop %v324
  %v341 = vtanh.pop %v325
  %v342 = vtanh.pop %v326
  %v343 = vtanh.pop %v327
  %v344 = vtanh.pop %v328
  %v345 = vtanh.pop %v329
  %v346 = vtanh.pop %v330
  %v347 = vtanh.pop %v331
  %v348 = vtanh.pop %v332
  %v349 = vtanh.pop %v333
  %v350 = vtanh.pop %v334
  %v351 = vadd.f32 %v335, 1.0
  %v352 = vadd.f32 %v336, 1.0
  %v353 = vadd.f32 %v337, 1.0
  %v354 = vadd.f32 %v338, 1.0
  %v355 = vadd.f32 %v339, 1.0
  %v356 = vadd.f32 %v340, 1.0
  %v357 = vadd.f32 %v341, 1.0
  %v358 = vadd.f32 %v342, 1.0
  %v359 = vadd.f32 %v343, 1.0
  %v360 = vadd.f32 %v344, 1.0
  %v361 = vadd.f32 %v345, 1.0
  %v362 = vadd.f32 %v346, 1.0
  %v363 = vadd.f32 %v347, 1.0
  %v364 = vadd.f32 %v348, 1.0
  %v365 = vadd.f32 %v349, 1.0
  %v366 = vadd.f32 %v350, 1.0
  %v367 = vmul.f32 %v239, %v351
  %v368 = vmul.f32 %v240, %v352
  %v369 = vmul.f32 %v241, %v353
  %v370 = vmul.f32 %v242, %v354
  %v371 = vmul.f32 %v243, %v355
  %v372 = vmul.f32 %v244, %v356
  %v373 = vmul.f32 %v245, %v357
  %v374 = vmul.f32 %v246, %v358
  %v375 = vmul.f32 %v247, %v359
  %v376 = vmul.f32 %v248, %v360
  %v377 = vmul.f32 %v249, %v361
  %v378 = vmul.f32 %v250, %v362
  %v379 = vmul.f32 %v251, %v363
  %v380 = vmul.f32 %v252, %v364
  %v381 = vmul.f32 %v253, %v365
  %v382 = vmul.f32 %v254, %v366
  %vm383 = vcmask 261120
  %384 = vst.msk [vmem:[%s3] sm:$0xff] %vm383, %v367
  %385 = vst.msk [vmem:[%s3 + $0x8] sm:$0xff] %vm383, %v368
  %386 = vst.msk [vmem:[%s3 + $0x10] sm:$0xff] %vm383, %v369
  %387 = vst.msk [vmem:[%s3 + $0x18] sm:$0xff] %vm383, %v370
  %388 = vst.msk [vmem:[%s3 + $0x20] sm:$0xff] %vm383, %v371
  %389 = vst.msk [vmem:[%s3 + $0x28] sm:$0xff] %vm383, %v372
  %390 = vst.msk [vmem:[%s3 + $0x30] sm:$0xff] %vm383, %v373
  %391 = vst.msk [vmem:[%s3 + $0x38] sm:$0xff] %vm383, %v374
  %392 = vst.msk [vmem:[%s3 + $0x40] sm:$0xff] %vm383, %v375
  %393 = vst.msk [vmem:[%s3 + $0x48] sm:$0xff] %vm383, %v376
  %394 = vst.msk [vmem:[%s3 + $0x50] sm:$0xff] %vm383, %v377
  %395 = vst.msk [vmem:[%s3 + $0x58] sm:$0xff] %vm383, %v378
  %396 = vst.msk [vmem:[%s3 + $0x60] sm:$0xff] %vm383, %v379
  %397 = vst.msk [vmem:[%s3 + $0x68] sm:$0xff] %vm383, %v380
  %398 = vst.msk [vmem:[%s3 + $0x70] sm:$0xff] %vm383, %v381
  %399 = vst.msk [vmem:[%s3 + $0x78] sm:$0xff] %vm383, %v382
  // Predicated region
  $region14: #{patch_embed.2} parent=0 // pred_check
    _
  $region15: #{patch_embed.2} parent=0 // pred_check_branch
    %401 = sbr.rel (0) target = $region17
  $region16: #{patch_embed.2} parent=0 // pred_region
    _
  $region17: #{patch_embed.2} parent=0 // pred_fallthru
    _
  // Predicated region
  $region18: #{patch_embed.2} parent=0 // pred_check
    _
  $region19: #{patch_embed.2} parent=0 // pred_check_branch
    %403 = sbr.rel (0) target = $region21
  $region20: #{patch_embed.2} parent=0 // pred_region
    _
  $region21: #{patch_embed.2} parent=0 // pred_fallthru
    _

// kernel: patch_embed.3
$region0: #{patch_embed.3}
  #allocation0 [shape = 'u32[]', space=smem, size = 0x4, offset = 0x4, fixed_abs, tag = 'smem constant byte address 0x4 - core index']
  #allocation1 [shape = 'u32[144,128]{1,0:T(1,128)}', space=vmem, size = 0x12000, scoped, tag = 'internal scratch']
  %s0 = inlined_call_operand.vmem [shape: f32[32,288], index: 0, kind: input, shape index: {}]
  %s1 = inlined_call_operand.vmem [shape: f32[288,64], index: 1, kind: input, shape index: {}]
  %s2 = inlined_call_operand.vmem [shape: f32[1,64], index: 2, kind: input, shape index: {}]
  %s3 = inlined_call_operand.hbm [shape: f32[32,64], index: 3, kind: output, shape index: {}]
  %s4 = sld [smem:[#allocation0]]
  $region22: #{patch_embed.3} parent=0
    _
  %s6 = ssub.s32 1, %s4
  %s7 = scalar_select 0, %s6, %s4
  $region1: #{patch_embed.3} parent=0
    #allocation2 [shape = 'u8[16384]{0}', space=vmem, size = 0x4000, scoped, tag = 'output window, operand 0, single buffered']
    #allocation3 [shape = 's32[1]{0}', space=sflag, size = 0x4, scoped, tag = 'scoped memory for patch_embed.3']
    %8 = vsyncpa [#allocation3], 0
    // Predicated region
    $region2: #{patch_embed.3} parent=1 // pred_check
      _
    $region3: #{patch_embed.3} parent=1 // pred_check_branch
      %10 = sbr.rel (0) target = $region5
    $region4: #{patch_embed.3} parent=1 // pred_region
      _
    $region5: #{patch_embed.3} parent=1 // pred_fallthru
      _
    // Predicated region
    $region6: #{patch_embed.3} parent=1 // pred_check
      _
    $region7: #{patch_embed.3} parent=1 // pred_check_branch
      %12 = sbr.rel (0) target = $region9
    $region8: #{patch_embed.3} parent=1 // pred_region
      _
    $region9: #{patch_embed.3} parent=1 // pred_fallthru
      _
    // Predicated region
    $region10: #{patch_embed.3} parent=1 // pred_check
      _
    $region11: #{patch_embed.3} parent=1 // pred_check_branch
      %14 = sbr.rel (0) target = $region13
    $region12: #{patch_embed.3} parent=1 // pred_region
      _
    $region13: #{patch_embed.3} parent=1 // pred_fallthru
      _
    %v15 = vld [vmem:[%s0] sm:$0xff]
    %v16 = vld [vmem:[%s0 + $0x8] sm:$0xff]
    %v17 = vld [vmem:[%s0 + $0x10] sm:$0xff]
    %v18 = vld [vmem:[%s0 + $0x18] sm:$0xff]
    %v19 = vld [vmem:[%s0 + $0x20] sm:$0xff]
    %v20 = vld [vmem:[%s0 + $0x28] sm:$0xff]
    %v21 = vld [vmem:[%s0 + $0x30] sm:$0xff]
    %v22 = vld [vmem:[%s0 + $0x38] sm:$0xff]
    %v23 = vld [vmem:[%s0 + $0x40] sm:$0xff]
    %v24 = vld [vmem:[%s0 + $0x48] sm:$0xff]
    %v25 = vld [vmem:[%s0 + $0x50] sm:$0xff]
    %v26 = vld [vmem:[%s0 + $0x58] sm:$0xff]
    %v27 = vld [vmem:[%s1] sm:$0xff]
    %v28 = vld [vmem:[%s1 + $0x8] sm:$0xff]
    %v29 = vld [vmem:[%s1 + $0x10] sm:$0xff]
    %v30 = vld [vmem:[%s1 + $0x18] sm:$0xff]
    %v31 = vld [vmem:[%s1 + $0x20] sm:$0xff]
    %v32 = vld [vmem:[%s1 + $0x28] sm:$0xff]
    %v33 = vld [vmem:[%s1 + $0x30] sm:$0xff]
    %v34 = vld [vmem:[%s1 + $0x38] sm:$0xff]
    %v35 = vld [vmem:[%s1 + $0x40] sm:$0xff]
    %v36 = vld [vmem:[%s1 + $0x48] sm:$0xff]
    %v37 = vld [vmem:[%s1 + $0x50] sm:$0xff]
    %v38 = vld [vmem:[%s1 + $0x58] sm:$0xff]
    %v39 = vld [vmem:[%s1 + $0x60] sm:$0xff]
    %v40 = vld [vmem:[%s1 + $0x68] sm:$0xff]
    %v41 = vld [vmem:[%s1 + $0x70] sm:$0xff]
    %v42 = vld [vmem:[%s1 + $0x78] sm:$0xff]
    %v43 = vld [vmem:[%s1 + $0x80] sm:$0xff]
    %v44 = vld [vmem:[%s1 + $0x88] sm:$0xff]
    %v45 = vld [vmem:[%s1 + $0x90] sm:$0xff]
    %v46 = vld [vmem:[%s1 + $0x98] sm:$0xff]
    %v47 = vld [vmem:[%s1 + $0xa0] sm:$0xff]
    %v48 = vld [vmem:[%s1 + $0xa8] sm:$0xff]
    %v49 = vld [vmem:[%s1 + $0xb0] sm:$0xff]
    %v50 = vld [vmem:[%s1 + $0xb8] sm:$0xff]
    %v51 = vld [vmem:[%s1 + $0xc0] sm:$0xff]
    %v52 = vld [vmem:[%s1 + $0xc8] sm:$0xff]
    %v53 = vld [vmem:[%s1 + $0xd0] sm:$0xff]
    %v54 = vld [vmem:[%s1 + $0xd8] sm:$0xff]
    %v55 = vld [vmem:[%s1 + $0xe0] sm:$0xff]
    %v56 = vld [vmem:[%s1 + $0xe8] sm:$0xff]
    %v57 = vld [vmem:[%s1 + $0xf0] sm:$0xff]
    %v58 = vld [vmem:[%s1 + $0xf8] sm:$0xff]
    %v59 = vld [vmem:[%s1 + $0x100] sm:$0xff]
    %v60 = vld [vmem:[%s1 + $0x108] sm:$0xff]
    %v61 = vld [vmem:[%s1 + $0x110] sm:$0xff]
    %v62 = vld [vmem:[%s1 + $0x118] sm:$0xff]
    %v63 = vld [vmem:[%s2] sm:$0x1]
    %v65 = vlaneseq
    %v66 = vshrl.u32 %v65, 7
    %v67 = vsub.s32 0, %v66
    %v68 = vrot.slane %v63, %v67
    %vm70 = vcmask 261120
    %v72 = vsel %vm70, %v17, 0
    %v75 = vsel %vm70, %v20, 0
    %v78 = vsel %vm70, %v23, 0
    %v81 = vsel %vm70, %v26, 0
    %83 = vmatprep.subr.mxu0 0.0
    %84 = vmatpush1.msra.mxu0 %v27
    %85 = vmatprep.subr.mxu0 0.0
    %86 = vmatpush1.msra.mxu0 %v28
    %87 = vmatprep.subr.mxu0 0.0
    %88 = vmatpush1.msra.mxu0 %v29
    %89 = vmatprep.subr.mxu0 0.0
    %90 = vmatpush1.msra.mxu0 %v30
    %91 = vmatprep.subr.mxu0 0.0
    %92 = vmatpush1.msra.mxu0 %v31
    %93 = vmatprep.subr.mxu0 0.0
    %94 = vmatpush1.msra.mxu0 %v32
    %95 = vmatprep.subr.mxu0 0.0
    %96 = vmatpush1.msra.mxu0 %v33
    %97 = vmatprep.subr.mxu0 0.0
    %98 = vmatpush1.msra.mxu0 %v34
    %99 = vmatprep.subr.mxu0 0.0
    %100 = vmatpush1.msra.mxu0 %v35
    %101 = vmatprep.subr.mxu0 0.0
    %102 = vmatpush1.msra.mxu0 %v36
    %103 = vmatprep.subr.mxu0 0.0
    %104 = vmatpush1.msra.mxu0 %v37
    %105 = vmatprep.subr.mxu0 0.0
    %106 = vmatpush1.msra.mxu0 %v38
    %107 = vmatprep.subr.mxu0 0.0
    %108 = vmatpush1.msra.mxu0 %v39
    %109 = vmatprep.subr.mxu0 0.0
    %110 = vmatpush1.msra.mxu0 %v40
    %111 = vmatprep.subr.mxu0 0.0
    %112 = vmatpush1.msra.mxu0 %v41
    %113 = vmatprep.subr.mxu0 0.0
    %114 = vmatpush1.msra.mxu0 %v42
    %115 = vmatprep.subr.mxu0 0.0
    %116 = vmatpush1.msra.mxu0 %v43
    %117 = vmatprep.subr.mxu0 0.0
    %118 = vmatpush1.msra.mxu0 %v44
    %119 = vmatprep.subr.mxu0 0.0
    %120 = vmatpush1.msra.mxu0 %v45
    %121 = vmatprep.subr.mxu0 0.0
    %122 = vmatpush1.msra.mxu0 %v46
    %123 = vmatprep.subr.mxu0 0.0
    %124 = vmatpush1.msra.mxu0 %v47
    %125 = vmatprep.subr.mxu0 0.0
    %126 = vmatpush1.msra.mxu0 %v48
    %127 = vmatprep.subr.mxu0 0.0
    %128 = vmatpush1.msra.mxu0 %v49
    %129 = vmatprep.subr.mxu0 0.0
    %130 = vmatpush1.msra.mxu0 %v50
    %131 = vmatprep.subr.mxu0 0.0
    %132 = vmatpush1.msra.mxu0 %v51
    %133 = vmatprep.subr.mxu0 0.0
    %134 = vmatpush1.msra.mxu0 %v52
    %135 = vmatprep.subr.mxu0 0.0
    %136 = vmatpush1.msra.mxu0 %v53
    %137 = vmatprep.subr.mxu0 0.0
    %138 = vmatpush1.msra.mxu0 %v54
    %139 = vmatprep.subr.mxu0 0.0
    %140 = vmatpush1.msra.mxu0 %v55
    %141 = vmatprep.subr.mxu0 0.0
    %142 = vmatpush1.msra.mxu0 %v56
    %143 = vmatprep.subr.mxu0 0.0
    %144 = vmatpush1.msra.mxu0 %v57
    %145 = vmatprep.subr.mxu0 0.0
    %146 = vmatpush1.msra.mxu0 %v58
    %147 = vmatprep.mubr.f32.mxu0 %v16
    %148 = vmatmul.mubr.f32.gmra.mrb[0].mxu0 %v15
    %v149 = vpop.f32.mrb[0].mxu0
    %v150 = vadd.f32 %v68, %v149
    %v151 = vpop.f32.mrb[0].mxu0
    %152 = vmatprep.mubr.f32.mxu0 %v19
    %153 = vmatmul.mubr.f32.gmra.mrb[0].mxu0 %v18
    %v154 = vpop.f32.mrb[0].mxu0
    %v155 = vadd.f32 %v68, %v154
    %v156 = vpop.f32.mrb[0].mxu0
    %157 = vmatprep.mubr.f32.mxu0 %v22
    %158 = vmatmul.mubr.f32.gmra.mrb[0].mxu0 %v21
    %v159 = vpop.f32.mrb[0].mxu0
    %v160 = vadd.f32 %v68, %v159
    %v161 = vpop.f32.mrb[0].mxu0
    %162 = vmatprep.mubr.f32.mxu0 %v25
    %163 = vmatmul.mubr.f32.gmra.mrb[0].mxu0 %v24
    %v164 = vpop.f32.mrb[0].mxu0
    %v165 = vadd.f32 %v68, %v164
    %v166 = vpop.f32.mrb[0].mxu0
    %167 = vdwg.mxu0
    %168 = vmatprep.subr.mxu0 0.0
    %169 = vmatpush1.msra.mxu0 %v59
    %170 = vmatprep.subr.mxu0 0.0
    %171 = vmatpush1.msra.mxu0 %v60
    %172 = vmatprep.subr.mxu0 0.0
    %173 = vmatpush1.msra.mxu0 %v61
    %174 = vmatprep.subr.mxu0 0.0
    %175 = vmatpush1.msra.mxu0 %v62
    %176 = vmatprep.subr.mxu0 0.0
    %177 = vmatpush1.msra.mxu0 0.0
    %178 = vmatprep.subr.mxu0 0.0
    %179 = vmatpush1.msra.mxu0 0.0
    %180 = vmatprep.subr.mxu0 0.0
    %181 = vmatpush1.msra.mxu0 0.0
    %182 = vmatprep.subr.mxu0 0.0
    %183 = vmatpush1.msra.mxu0 0.0
    %184 = vmatprep.subr.mxu0 0.0
    %185 = vmatpush1.msra.mxu0 0.0
    %186 = vmatprep.subr.mxu0 0.0
    %187 = vmatpush1.msra.mxu0 0.0
    %188 = vmatprep.subr.mxu0 0.0
    %189 = vmatpush1.msra.mxu0 0.0
    %190 = vmatprep.subr.mxu0 0.0
    %191 = vmatpush1.msra.mxu0 0.0
    %192 = vmatprep.subr.mxu0 0.0
    %193 = vmatpush1.msra.mxu0 0.0
    %194 = vmatprep.subr.mxu0 0.0
    %195 = vmatpush1.msra.mxu0 0.0
    %196 = vmatprep.subr.mxu0 0.0
    %197 = vmatpush1.msra.mxu0 0.0
    %198 = vmatprep.subr.mxu0 0.0
    %199 = vmatpush1.msra.mxu0 0.0
    %200 = vmatprep.subr.mxu0 0.0
    %201 = vmatpush1.msra.mxu0 0.0
    %202 = vmatprep.subr.mxu0 0.0
    %203 = vmatpush1.msra.mxu0 0.0
    %204 = vmatprep.subr.mxu0 0.0
    %205 = vmatpush1.msra.mxu0 0.0
    %206 = vmatprep.subr.mxu0 0.0
    %207 = vmatpush1.msra.mxu0 0.0
    %208 = vmatprep.subr.mxu0 0.0
    %209 = vmatpush1.msra.mxu0 0.0
    %210 = vmatprep.subr.mxu0 0.0
    %211 = vmatpush1.msra.mxu0 0.0
    %212 = vmatprep.subr.mxu0 0.0
    %213 = vmatpush1.msra.mxu0 0.0
    %214 = vmatprep.subr.mxu0 0.0
    %215 = vmatpush1.msra.mxu0 0.0
    %216 = vmatprep.subr.mxu0 0.0
    %217 = vmatpush1.msra.mxu0 0.0
    %218 = vmatprep.subr.mxu0 0.0
    %219 = vmatpush1.msra.mxu0 0.0
    %220 = vmatprep.subr.mxu0 0.0
    %221 = vmatpush1.msra.mxu0 0.0
    %222 = vmatprep.subr.mxu0 0.0
    %223 = vmatpush1.msra.mxu0 0.0
    %224 = vmatprep.subr.mxu0 0.0
    %225 = vmatpush1.msra.mxu0 0.0
    %226 = vmatprep.subr.mxu0 0.0
    %227 = vmatpush1.msra.mxu0 0.0
    %228 = vmatprep.subr.mxu0 0.0
    %229 = vmatpush1.msra.mxu0 0.0
    %230 = vmatprep.subr.mxu0 0.0
    %231 = vmatpush1.msra.mxu0 0.0
    %232 = vmatprep.mubr.f32.mxu0 0.0
    %233 = vmatmul.mubr.f32.gmra.mrb[0].mxu0 %v72
    %v234 = vpop.f32.mrb[0].mxu0
    %v235 = vadd.f32 %v150, %v234
    %v236 = vpop.f32.mrb[0].mxu0
    %237 = vmatprep.mubr.f32.mxu0 0.0
    %238 = vmatmul.mubr.f32.gmra.mrb[0].mxu0 %v75
    %v239 = vpop.f32.mrb[0].mxu0
    %v240 = vadd.f32 %v155, %v239
    %v241 = vpop.f32.mrb[0].mxu0
    %242 = vmatprep.mubr.f32.mxu0 0.0
    %243 = vmatmul.mubr.f32.gmra.mrb[0].mxu0 %v78
    %v244 = vpop.f32.mrb[0].mxu0
    %v245 = vadd.f32 %v160, %v244
    %v246 = vpop.f32.mrb[0].mxu0
    %247 = vmatprep.mubr.f32.mxu0 0.0
    %248 = vmatmul.mubr.f32.gmra.mrb[0].mxu0 %v81
    %v249 = vpop.f32.mrb[0].mxu0
    %v250 = vadd.f32 %v165, %v249
    %v251 = vpop.f32.mrb[0].mxu0
    %252 = vdwg.mxu0
    %vm253 = vcmask 523264
    %254 = vst.msk [vmem:[#allocation2] sm:$0xff] %vm253, %v235
    %255 = vst.msk [vmem:[#allocation2 + $0x8] sm:$0xff] %vm253, %v240
    %256 = vst.msk [vmem:[#allocation2 + $0x10] sm:$0xff] %vm253, %v245
    %257 = vst.msk [vmem:[#allocation2 + $0x18] sm:$0xff] %vm253, %v250
    // Predicated region
    $region14: #{patch_embed.3} parent=1 // pred_check
      _
    $region15: #{patch_embed.3} parent=1 // pred_check_branch
      %259 = sbr.rel (0) target = $region17
    $region16: #{patch_embed.3} parent=1 // pred_region
      %s261 = ssub.s32 512, 512
      %262 = vsyncadd [#allocation3], %s261
      %s263 = sshll.u32 [#allocation2], 4
      %s264 = int_to_ptr.vmem [resolvable:$true] %s263
      %269 = dma.vmem_to_hbm [thread:$0]  %s264, 512, %s3, [#allocation3], 128, 128, 8
    $region17: #{patch_embed.3} parent=1 // pred_fallthru
      _
    // Predicated region
    $region18: #{patch_embed.3} parent=1 // pred_check
      _
    $region19: #{patch_embed.3} parent=1 // pred_check_branch
      %271 = sbr.rel (0) target = $region21
    $region20: #{patch_embed.3} parent=1 // pred_region
      %272 = dma.done [#allocation3], 512
    $region21: #{patch_embed.3} parent=1 // pred_fallthru
      _
    %273 = vsyncpa [#allocation3], 1

</llo_original>
